<compile_context>
chip_gen: v5e
topology: v5e:2x2
jax: 0.10.0
libtpu: 0.0.40
codegen_flags: <defaults>
</compile_context>

<pallas_src>
import jax
import jax.numpy as jnp
from jax.experimental import pallas as pl
from jax.experimental.pallas import tpu as pltpu


def _make_dnn_kernel(compute_dtype):
    def dnn_kernel(x_ref, w1_ref, b1_ref, w2_ref, b2_ref, w3_ref, b3_ref,
                   o_ref):
        # In-kernel cast of the streamed operand (cheap VPU work hidden under
        # the DMA); accumulation, bias-add and ReLU are always f32.
        x = x_ref[...].astype(compute_dtype)
        # Layer 1: [TB, d_in] @ [d_in, 128]
        h1 = jnp.dot(x, w1_ref[...], preferred_element_type=jnp.float32)
        h1 = jnp.maximum(h1 + b1_ref[...], 0.0)
        # Layer 2: [TB, 128] @ [128, 64]
        h2 = jnp.dot(h1.astype(compute_dtype), w2_ref[...],
                     preferred_element_type=jnp.float32)
        h2 = jnp.maximum(h2 + b2_ref[...], 0.0)
        # Layer 3: [TB, 64] @ [64, d_out]
        h3 = jnp.dot(h2.astype(compute_dtype), w3_ref[...],
                     preferred_element_type=jnp.float32)
        o_ref[...] = jnp.maximum(h3 + b3_ref[...], 0.0).astype(o_ref.dtype)

    return dnn_kernel


def _choose_block_b(B, x_itemsize, d_in, d_out, *, min_blocks=4,
                    vmem_budget_bytes=8 << 20):
    """Pick the batch tile from a VMEM budget (bigger tiles amortize the
    ~0.35 us per-grid-step overhead; this kernel is HBM/overhead bound)."""
    # Per-row VMEM: double-buffered x and out tiles plus the f32 intermediates
    # (h1[.,128], h2[.,64], h3[.,d_out]) the compiler materializes.
    per_row = 2 * d_in * x_itemsize + 2 * d_out * 4 + (128 + 64 + d_out) * 4
    if B <= 256:
        # Single block; multiple of 16 satisfies bf16 sublane packing (and
        # f32's 8).
        return min(max(-(-B // 16) * 16, 16), 256)
    tb = min(vmem_budget_bytes // per_row,       # VMEM-safe (v5e-safe budget)
             4096,                               # hard cap
             max(pl.cdiv(B, min_blocks), 256))   # keep >= min_blocks steps
    # Multiple of 256 fills MXU-M on v6e/v7x and is a multiple of v5e's 128.
    return max((tb // 256) * 256, 256)


def dnn_forward(x, params, *, block_b=None, compute_dtype=jnp.float32,
                out_dtype=jnp.float32):
    """Fused forward pass of the 3-layer MLP, tiled over the batch axis.

    x: [B, d_in] (any float dtype; cast to compute_dtype inside the kernel).
    params: dict of w1,b1,w2,b2,w3,b3 with weights stored as [in, out].
    compute_dtype: dtype fed to the MXU (f32 or bf16); accumulation, bias-add
                   and ReLU are always f32.
    out_dtype: dtype of the stored output (f32 default, bf16 halves traffic).
    """
    B, d_in = x.shape
    d_out = params["w3"].shape[1]

    tb = block_b if block_b is not None else _choose_block_b(
        B, x.dtype.itemsize, d_in, d_out)
    n_blocks = pl.cdiv(B, tb)  # partial last block: Pallas masks the stores

    # Weights are tiny and VMEM-resident across the whole grid: cast once in
    # the wrapper. Biases stay f32 (bias + ReLU done in f32 in the kernel).
    w1 = params["w1"].astype(compute_dtype)
    w2 = params["w2"].astype(compute_dtype)
    w3 = params["w3"].astype(compute_dtype)
    b1 = params["b1"].astype(jnp.float32)
    b2 = params["b2"].astype(jnp.float32)
    b3 = params["b3"].astype(jnp.float32)

    def batch_map(i):          # x / out: walk the batch axis
        return (i, 0)

    def const_map(i):          # weights / biases: same block every step
        return (0, 0)

    in_specs = [
        pl.BlockSpec((tb, d_in), batch_map),
        pl.BlockSpec(w1.shape, const_map),
        pl.BlockSpec(b1.shape, const_map),
        pl.BlockSpec(w2.shape, const_map),
        pl.BlockSpec(b2.shape, const_map),
        pl.BlockSpec(w3.shape, const_map),
        pl.BlockSpec(b3.shape, const_map),
    ]

    h1, h2 = 128, 64
    flops = 2 * B * (d_in * h1 + h1 * h2 + h2 * d_out)
    bytes_accessed = (
        x.size * x.dtype.itemsize
        + sum(a.size * a.dtype.itemsize for a in (w1, b1, w2, b2, w3, b3))
        + B * d_out * jnp.dtype(out_dtype).itemsize)

    return pl.pallas_call(
        _make_dnn_kernel(compute_dtype),
        out_shape=jax.ShapeDtypeStruct((B, d_out), out_dtype),
        grid=(n_blocks,),
        in_specs=in_specs,
        out_specs=pl.BlockSpec((tb, d_out), batch_map),
        compiler_params=pltpu.CompilerParams(
            dimension_semantics=("parallel",)),
        cost_estimate=pl.CostEstimate(flops=flops, transcendentals=0,
                                      bytes_accessed=bytes_accessed),
    )(x, w1, b1, w2, b2, w3, b3)


def init_params(key, d_in, d_out):
    """Deterministic init mirroring nn.Linear's uniform(-1/sqrt(fan_in), +)."""
    ks = jax.random.split(key, 6)

    def linear(kw, kb, fan_in, fan_out):
        bound = 1.0 / jnp.sqrt(jnp.float32(fan_in))
        # stored as [in, out] (transposed relative to PyTorch's [out, in])
        w = jax.random.uniform(kw, (fan_in, fan_out), jnp.float32, -bound, bound)
        b = jax.random.uniform(kb, (1, fan_out), jnp.float32, -bound, bound)
        return w, b

    w1, b1 = linear(ks[0], ks[1], d_in, 128)
    w2, b2 = linear(ks[2], ks[3], 128, 64)
    w3, b3 = linear(ks[4], ks[5], 64, d_out)
    return {"w1": w1, "b1": b1, "w2": w2, "b2": b2, "w3": w3, "b3": b3}


def dnn_reference(x, p):
    h = jnp.maximum(x @ p["w1"] + p["b1"], 0.0)
    h = jnp.maximum(h @ p["w2"] + p["b2"], 0.0)
    h = jnp.maximum(h @ p["w3"] + p["b3"], 0.0)
    return h


if __name__ == "__main__":
    key = jax.random.PRNGKey(0)
    k_x, k_p = jax.random.split(key)

    # B deliberately NOT a multiple of the batch tile to exercise the masked
    # partial-last-block path (no wrapper pad/slice any more).
    B, d_in, d_out = 384, 32, 16
    x = jax.random.normal(k_x, (B, d_in), jnp.float32)
    params = init_params(k_p, d_in, d_out)

    ref = dnn_reference(x, params)

    # f32 path (tight tolerance so dtype mix-ups can't hide).
    out_f32 = jax.block_until_ready(dnn_forward(x, params))
    assert out_f32.shape == (B, d_out) and out_f32.dtype == jnp.float32
    assert jnp.allclose(out_f32, ref, atol=1e-5, rtol=1e-5), "f32 mismatch"

    # bf16-matmul / f32-accumulate path (x cast in-kernel; no extra HBM pass).
    # NOTE: this intentionally quantizes layer-1 inputs as well as weights.
    out_bf16 = jax.block_until_ready(
        dnn_forward(x, params, compute_dtype=jnp.bfloat16))
    assert out_bf16.shape == (B, d_out) and out_bf16.dtype == jnp.float32
    assert jnp.allclose(out_bf16, ref, atol=1e-1, rtol=1e-1), "bf16 mismatch"

    # bf16 output path (halves output HBM traffic when downstream tolerates).
    out_bf16_out = jax.block_until_ready(
        dnn_forward(x, params, compute_dtype=jnp.bfloat16,
                    out_dtype=jnp.bfloat16))
    assert out_bf16_out.shape == (B, d_out)
    assert out_bf16_out.dtype == jnp.bfloat16
    assert jnp.allclose(out_bf16_out.astype(jnp.float32), ref,
                        atol=1e-1, rtol=1e-1), "bf16-out mismatch"

    print("KERNEL_OK")
</pallas_src>

<mosaic_0001>
module attributes {stable_mosaic.version = 11 : i64} {
  func.func @dnn_kernel(%arg0: i32, %arg1: memref<256x32xf32, #tpu.memory_space<vmem>>, %arg2: memref<32x128xf32, #tpu.memory_space<vmem>>, %arg3: memref<1x128xf32, #tpu.memory_space<vmem>>, %arg4: memref<128x64xf32, #tpu.memory_space<vmem>>, %arg5: memref<1x64xf32, #tpu.memory_space<vmem>>, %arg6: memref<64x16xf32, #tpu.memory_space<vmem>>, %arg7: memref<1x16xf32, #tpu.memory_space<vmem>>, %arg8: memref<256x16xf32, #tpu.memory_space<vmem>>) attributes {dimension_semantics = [#tpu.dimension_semantics<parallel>], iteration_bounds = array<i64: 2>, scalar_prefetch = 0 : i64, scratch_operands = 0 : i64, tpu.core_type = #tpu.core_type<tc>, window_params = [{transform_indices = @transform_0, window_bounds = array<i64: 256, 32>}, {pipeline_mode = #tpu.pipeline_mode<synchronous>, transform_indices = @transform_1, window_bounds = array<i64: 32, 128>}, {pipeline_mode = #tpu.pipeline_mode<synchronous>, transform_indices = @transform_2, window_bounds = array<i64: 1, 128>}, {pipeline_mode = #tpu.pipeline_mode<synchronous>, transform_indices = @transform_3, window_bounds = array<i64: 128, 64>}, {pipeline_mode = #tpu.pipeline_mode<synchronous>, transform_indices = @transform_4, window_bounds = array<i64: 1, 64>}, {pipeline_mode = #tpu.pipeline_mode<synchronous>, transform_indices = @transform_5, window_bounds = array<i64: 64, 16>}, {pipeline_mode = #tpu.pipeline_mode<synchronous>, transform_indices = @transform_6, window_bounds = array<i64: 1, 16>}, {transform_indices = @transform_7, window_bounds = array<i64: 256, 16>}]} {
    %c0 = arith.constant 0 : index
    %c0_0 = arith.constant 0 : index
    %0 = vector.load %arg1[%c0, %c0_0] : memref<256x32xf32, #tpu.memory_space<vmem>>, vector<256x32xf32>
    %c0_1 = arith.constant 0 : index
    %c0_2 = arith.constant 0 : index
    %1 = vector.load %arg2[%c0_1, %c0_2] : memref<32x128xf32, #tpu.memory_space<vmem>>, vector<32x128xf32>
    %cst = arith.constant dense<0.000000e+00> : vector<256x128xf32>
    %2 = tpu.matmul %0, %1, %cst {dimension_numbers = #tpu.dot_dimension_numbers<[1], [0], [0], [1], [0, 0, 1, 1], [], []>} : vector<256x32xf32>, vector<32x128xf32>, vector<256x128xf32> -> vector<256x128xf32>
    %c0_3 = arith.constant 0 : index
    %c0_4 = arith.constant 0 : index
    %3 = vector.load %arg3[%c0_3, %c0_4] : memref<1x128xf32, #tpu.memory_space<vmem>>, vector<1x128xf32>
    %4 = vector.broadcast %3 : vector<1x128xf32> to vector<256x128xf32>
    %5 = arith.addf %2, %4 : vector<256x128xf32>
    %cst_5 = arith.constant 0.000000e+00 : f32
    %6 = vector.broadcast %cst_5 : f32 to vector<256x128xf32>
    %7 = arith.maximumf %5, %6 : vector<256x128xf32>
    %c0_6 = arith.constant 0 : index
    %c0_7 = arith.constant 0 : index
    %8 = vector.load %arg4[%c0_6, %c0_7] : memref<128x64xf32, #tpu.memory_space<vmem>>, vector<128x64xf32>
    %cst_8 = arith.constant dense<0.000000e+00> : vector<256x64xf32>
    %9 = tpu.matmul %7, %8, %cst_8 {dimension_numbers = #tpu.dot_dimension_numbers<[1], [0], [0], [1], [0, 0, 1, 1], [], []>} : vector<256x128xf32>, vector<128x64xf32>, vector<256x64xf32> -> vector<256x64xf32>
    %c0_9 = arith.constant 0 : index
    %c0_10 = arith.constant 0 : index
    %10 = vector.load %arg5[%c0_9, %c0_10] : memref<1x64xf32, #tpu.memory_space<vmem>>, vector<1x64xf32>
    %11 = vector.broadcast %10 : vector<1x64xf32> to vector<256x64xf32>
    %12 = arith.addf %9, %11 : vector<256x64xf32>
    %cst_11 = arith.constant 0.000000e+00 : f32
    %13 = vector.broadcast %cst_11 : f32 to vector<256x64xf32>
    %14 = arith.maximumf %12, %13 : vector<256x64xf32>
    %c0_12 = arith.constant 0 : index
    %c0_13 = arith.constant 0 : index
    %15 = vector.load %arg6[%c0_12, %c0_13] : memref<64x16xf32, #tpu.memory_space<vmem>>, vector<64x16xf32>
    %cst_14 = arith.constant dense<0.000000e+00> : vector<256x16xf32>
    %16 = tpu.matmul %14, %15, %cst_14 {dimension_numbers = #tpu.dot_dimension_numbers<[1], [0], [0], [1], [0, 0, 1, 1], [], []>} : vector<256x64xf32>, vector<64x16xf32>, vector<256x16xf32> -> vector<256x16xf32>
    %c0_15 = arith.constant 0 : index
    %c0_16 = arith.constant 0 : index
    %17 = vector.load %arg7[%c0_15, %c0_16] : memref<1x16xf32, #tpu.memory_space<vmem>>, vector<1x16xf32>
    %18 = vector.broadcast %17 : vector<1x16xf32> to vector<256x16xf32>
    %19 = arith.addf %16, %18 : vector<256x16xf32>
    %cst_17 = arith.constant 0.000000e+00 : f32
    %20 = vector.broadcast %cst_17 : f32 to vector<256x16xf32>
    %21 = arith.maximumf %19, %20 : vector<256x16xf32>
    %c0_18 = arith.constant 0 : index
    %c0_19 = arith.constant 0 : index
    %22 = vector.load %arg8[%c0_18, %c0_19] : memref<256x16xf32, #tpu.memory_space<vmem>>, vector<256x16xf32>
    tpu.vector_store %arg8[%c0_18, %c0_19], %21 {strides = array<i32>} : memref<256x16xf32, #tpu.memory_space<vmem>>, vector<256x16xf32>,
    return
  }
  func.func @transform_0(%arg0: i32) -> (i32, i32) {
    %c0_i32 = arith.constant 0 : i32
    %c0_i32_0 = arith.constant 0 : i32
    return %arg0, %c0_i32 : i32, i32
  }
  func.func @transform_1(%arg0: i32) -> (i32, i32) {
    %c0_i32 = arith.constant 0 : i32
    %c0_i32_0 = arith.constant 0 : i32
    %c0_i32_1 = arith.constant 0 : i32
    return %c0_i32, %c0_i32_0 : i32, i32
  }
  func.func @transform_2(%arg0: i32) -> (i32, i32) {
    %c0_i32 = arith.constant 0 : i32
    %c0_i32_0 = arith.constant 0 : i32
    %c0_i32_1 = arith.constant 0 : i32
    return %c0_i32, %c0_i32_0 : i32, i32
  }
  func.func @transform_3(%arg0: i32) -> (i32, i32) {
    %c0_i32 = arith.constant 0 : i32
    %c0_i32_0 = arith.constant 0 : i32
    %c0_i32_1 = arith.constant 0 : i32
    return %c0_i32, %c0_i32_0 : i32, i32
  }
  func.func @transform_4(%arg0: i32) -> (i32, i32) {
    %c0_i32 = arith.constant 0 : i32
    %c0_i32_0 = arith.constant 0 : i32
    %c0_i32_1 = arith.constant 0 : i32
    return %c0_i32, %c0_i32_0 : i32, i32
  }
  func.func @transform_5(%arg0: i32) -> (i32, i32) {
    %c0_i32 = arith.constant 0 : i32
    %c0_i32_0 = arith.constant 0 : i32
    %c0_i32_1 = arith.constant 0 : i32
    return %c0_i32, %c0_i32_0 : i32, i32
  }
  func.func @transform_6(%arg0: i32) -> (i32, i32) {
    %c0_i32 = arith.constant 0 : i32
    %c0_i32_0 = arith.constant 0 : i32
    %c0_i32_1 = arith.constant 0 : i32
    return %c0_i32, %c0_i32_0 : i32, i32
  }
  func.func @transform_7(%arg0: i32) -> (i32, i32) {
    %c0_i32 = arith.constant 0 : i32
    %c0_i32_0 = arith.constant 0 : i32
    return %arg0, %c0_i32 : i32, i32
  }
}

</mosaic_0001>

<llo_original>
// kernel: tpu_custom_call.1
$region0: #{tpu_custom_call.1}
  #allocation0 [shape = 'u32[]', space=smem, size = 0x4, offset = 0x4, fixed_abs, tag = 'smem constant byte address 0x4 - core index']
  #allocation1 [shape = 'u32[72,128]{1,0:T(1,128)}', space=vmem, size = 0x9000, scoped, tag = 'internal scratch']
  %s0 = inlined_call_operand.vmem [shape: f32[384,32], index: 0, kind: input, shape index: {}]
  %s1 = inlined_call_operand.vmem [shape: f32[32,128], index: 1, kind: input, shape index: {}]
  %s2 = inlined_call_operand.vmem [shape: f32[1,128], index: 2, kind: input, shape index: {}]
  %s3 = inlined_call_operand.vmem [shape: f32[128,64], index: 3, kind: input, shape index: {}]
  %s4 = inlined_call_operand.vmem [shape: f32[1,64], index: 4, kind: input, shape index: {}]
  %s5 = inlined_call_operand.vmem [shape: f32[64,16], index: 5, kind: input, shape index: {}]
  %s6 = inlined_call_operand.vmem [shape: f32[1,16], index: 6, kind: input, shape index: {}]
  %s7 = inlined_call_operand.vmem [shape: f32[384,16], index: 7, kind: output, shape index: {}]
  %s8 = sld [smem:[#allocation0]]
  $region109: #{tpu_custom_call.1} parent=0
    _
  %s10 = ssub.s32 1, %s8
  %s11 = scalar_select 0, %s10, %s8
  $region1: #{tpu_custom_call.1} parent=0
    #allocation2 [shape = 'u8[262144]{0}', space=vmem, size = 0x40000, scoped, tag = 'output window, operand 0']
    loop: start=0, step=1, limit=4
    $region2: #{tpu_custom_call.1} parent=1 // loop_pre_header
      _
    $region3: #{tpu_custom_call.1} parent=1 // loop_header
      %s13 = sphi 0, %s17
      %p14 = scmp.ge.s32.totalorder %s13, 4
      %s23 = sphi 0, %s25
      %s26 = sphi 0, %s23
      %s27 = sphi 0, %s26
      %s43 = sphi 0, %s27
      %s47 = sphi 0, %s47
      %s49 = sphi 0, %s47
      %s50 = sphi 0, %s49
      %s64 = sphi 0, %s50
      %s68 = sphi 0, %s68
      %s70 = sphi 0, %s68
      %s71 = sphi 0, %s70
      %s85 = sphi 0, %s71
      %s89 = sphi 0, %s89
      %s91 = sphi 0, %s89
      %s92 = sphi 0, %s91
      %s106 = sphi 0, %s92
      %s110 = sphi 0, %s110
      %s112 = sphi 0, %s110
      %s113 = sphi 0, %s112
      %s127 = sphi 0, %s113
      %s131 = sphi 0, %s131
      %s133 = sphi 0, %s131
      %s134 = sphi 0, %s133
      %s148 = sphi 0, %s134
      %s152 = sphi 0, %s152
      %s154 = sphi 0, %s152
      %s155 = sphi 0, %s154
      %s169 = sphi 0, %s155
      %s175 = sphi 0, %s177
      %s178 = sphi 0, %s175
      %s179 = sphi 0, %s178
      %s195 = sphi 0, %s179
    $region4: #{tpu_custom_call.1} parent=1 // loop_header_branch
      %16 = sbr.rel (%p14) target = $region8
    $region5: #{tpu_custom_call.1} parent=1 // loop_body
      %s18 = ssub.s32 %s13, 1
      %s19 = ssub.s32 %s13, 2
      %s20 = sadd.s32 %s13, 1
      %s21 = ssub.s32 %s13, %s20
      %p22 = scmp.eq.s32.totalorder %s21, 0
      %s24 = sadd.s32 %s23, 1
      %s25 = scalar_select %p22, %s23, %s24
      %p28 = pneg %p22
      %p29 = scmp.eq.s32.totalorder %s13, 1
      %p30 = por %p28, %p29
      %p31 = scmp.ne.s32.totalorder %s23, %s26
      %p32 = scmp.eq.s32.totalorder %s13, 0
      %p33 = por %p31, %p32
      %p34 = scmp.ne.s32.totalorder %s23, %s26
      %p35 = scmp.eq.s32.totalorder %s18, 1
      %p36 = por %p34, %p35
      %p37 = scmp.ne.s32.totalorder %s26, %s27
      %p38 = scmp.eq.s32.totalorder %s18, 0
      %p39 = por %p37, %p38
      %p40 = scmp.ne.s32.totalorder %s26, %s27
      %p41 = scmp.eq.s32.totalorder %s19, 1
      %p42 = por %p40, %p41
      %p44 = scmp.ne.s32.totalorder %s27, %s43
      %p45 = scmp.eq.s32.totalorder %s19, 0
      %p46 = por %p44, %p45
      %s48 = sadd.s32 %s47, 1
      %p51 = scmp.eq.s32.totalorder %s13, 1
      %p52 = scmp.ne.s32.totalorder %s47, %s49
      %p53 = scmp.eq.s32.totalorder %s13, 0
      %p54 = por %p52, %p53
      %p55 = scmp.ne.s32.totalorder %s47, %s49
      %p56 = scmp.eq.s32.totalorder %s18, 1
      %p57 = por %p55, %p56
      %p58 = scmp.ne.s32.totalorder %s49, %s50
      %p59 = scmp.eq.s32.totalorder %s18, 0
      %p60 = por %p58, %p59
      %p61 = scmp.ne.s32.totalorder %s49, %s50
      %p62 = scmp.eq.s32.totalorder %s19, 1
      %p63 = por %p61, %p62
      %p65 = scmp.ne.s32.totalorder %s50, %s64
      %p66 = scmp.eq.s32.totalorder %s19, 0
      %p67 = por %p65, %p66
      %s69 = sadd.s32 %s68, 1
      %p72 = scmp.eq.s32.totalorder %s13, 1
      %p73 = scmp.ne.s32.totalorder %s68, %s70
      %p74 = scmp.eq.s32.totalorder %s13, 0
      %p75 = por %p73, %p74
      %p76 = scmp.ne.s32.totalorder %s68, %s70
      %p77 = scmp.eq.s32.totalorder %s18, 1
      %p78 = por %p76, %p77
      %p79 = scmp.ne.s32.totalorder %s70, %s71
      %p80 = scmp.eq.s32.totalorder %s18, 0
      %p81 = por %p79, %p80
      %p82 = scmp.ne.s32.totalorder %s70, %s71
      %p83 = scmp.eq.s32.totalorder %s19, 1
      %p84 = por %p82, %p83
      %p86 = scmp.ne.s32.totalorder %s71, %s85
      %p87 = scmp.eq.s32.totalorder %s19, 0
      %p88 = por %p86, %p87
      %s90 = sadd.s32 %s89, 1
      %p93 = scmp.eq.s32.totalorder %s13, 1
      %p94 = scmp.ne.s32.totalorder %s89, %s91
      %p95 = scmp.eq.s32.totalorder %s13, 0
      %p96 = por %p94, %p95
      %p97 = scmp.ne.s32.totalorder %s89, %s91
      %p98 = scmp.eq.s32.totalorder %s18, 1
      %p99 = por %p97, %p98
      %p100 = scmp.ne.s32.totalorder %s91, %s92
      %p101 = scmp.eq.s32.totalorder %s18, 0
      %p102 = por %p100, %p101
      %p103 = scmp.ne.s32.totalorder %s91, %s92
      %p104 = scmp.eq.s32.totalorder %s19, 1
      %p105 = por %p103, %p104
      %p107 = scmp.ne.s32.totalorder %s92, %s106
      %p108 = scmp.eq.s32.totalorder %s19, 0
      %p109 = por %p107, %p108
      %s111 = sadd.s32 %s110, 1
      %p114 = scmp.eq.s32.totalorder %s13, 1
      %p115 = scmp.ne.s32.totalorder %s110, %s112
      %p116 = scmp.eq.s32.totalorder %s13, 0
      %p117 = por %p115, %p116
      %p118 = scmp.ne.s32.totalorder %s110, %s112
      %p119 = scmp.eq.s32.totalorder %s18, 1
      %p120 = por %p118, %p119
      %p121 = scmp.ne.s32.totalorder %s112, %s113
      %p122 = scmp.eq.s32.totalorder %s18, 0
      %p123 = por %p121, %p122
      %p124 = scmp.ne.s32.totalorder %s112, %s113
      %p125 = scmp.eq.s32.totalorder %s19, 1
      %p126 = por %p124, %p125
      %p128 = scmp.ne.s32.totalorder %s113, %s127
      %p129 = scmp.eq.s32.totalorder %s19, 0
      %p130 = por %p128, %p129
      %s132 = sadd.s32 %s131, 1
      %p135 = scmp.eq.s32.totalorder %s13, 1
      %p136 = scmp.ne.s32.totalorder %s131, %s133
      %p137 = scmp.eq.s32.totalorder %s13, 0
      %p138 = por %p136, %p137
      %p139 = scmp.ne.s32.totalorder %s131, %s133
      %p140 = scmp.eq.s32.totalorder %s18, 1
      %p141 = por %p139, %p140
      %p142 = scmp.ne.s32.totalorder %s133, %s134
      %p143 = scmp.eq.s32.totalorder %s18, 0
      %p144 = por %p142, %p143
      %p145 = scmp.ne.s32.totalorder %s133, %s134
      %p146 = scmp.eq.s32.totalorder %s19, 1
      %p147 = por %p145, %p146
      %p149 = scmp.ne.s32.totalorder %s134, %s148
      %p150 = scmp.eq.s32.totalorder %s19, 0
      %p151 = por %p149, %p150
      %s153 = sadd.s32 %s152, 1
      %p156 = scmp.eq.s32.totalorder %s13, 1
      %p157 = scmp.ne.s32.totalorder %s152, %s154
      %p158 = scmp.eq.s32.totalorder %s13, 0
      %p159 = por %p157, %p158
      %p160 = scmp.ne.s32.totalorder %s152, %s154
      %p161 = scmp.eq.s32.totalorder %s18, 1
      %p162 = por %p160, %p161
      %p163 = scmp.ne.s32.totalorder %s154, %s155
      %p164 = scmp.eq.s32.totalorder %s18, 0
      %p165 = por %p163, %p164
      %p166 = scmp.ne.s32.totalorder %s154, %s155
      %p167 = scmp.eq.s32.totalorder %s19, 1
      %p168 = por %p166, %p167
      %p170 = scmp.ne.s32.totalorder %s155, %s169
      %p171 = scmp.eq.s32.totalorder %s19, 0
      %p172 = por %p170, %p171
      %s173 = ssub.s32 %s13, %s20
      %p174 = scmp.eq.s32.totalorder %s173, 0
      %s176 = sadd.s32 %s175, 1
      %s177 = scalar_select %p174, %s175, %s176
      %p180 = pneg %p174
      %p181 = scmp.eq.s32.totalorder %s13, 1
      %p182 = por %p180, %p181
      %p183 = scmp.ne.s32.totalorder %s175, %s178
      %p184 = scmp.eq.s32.totalorder %s13, 0
      %p185 = por %p183, %p184
      %p186 = scmp.ne.s32.totalorder %s175, %s178
      %p187 = scmp.eq.s32.totalorder %s18, 1
      %p188 = por %p186, %p187
      %p189 = scmp.ne.s32.totalorder %s178, %s179
      %p190 = scmp.eq.s32.totalorder %s18, 0
      %p191 = por %p189, %p190
      %p192 = scmp.ne.s32.totalorder %s178, %s179
      %p193 = scmp.eq.s32.totalorder %s19, 1
      %p194 = por %p192, %p193
      %p196 = scmp.ne.s32.totalorder %s179, %s195
      %p197 = scmp.eq.s32.totalorder %s19, 0
      %p198 = por %p196, %p197
      %p199 = scmp.le.s32.totalorder 1, %s13
      %p200 = scmp.lt.s32.totalorder %s13, 3
      %p201 = pnand %p199, %p200
      %p202 = pneg %p201
      // Predicated region
      $region9: #{tpu_custom_call.1} parent=5 // pred_check
        _
      $region10: #{tpu_custom_call.1} parent=5 // pred_check_branch
        %204 = sbr.rel (%p201) target = $region12
      $region11: #{tpu_custom_call.1} parent=5 // pred_region
        %s205 = ssub.s32 %s13, 1
        // Predicated region
        $region13: #{tpu_custom_call.1} parent=11 // pred_check
          %p206 = pneg %p60
        $region14: #{tpu_custom_call.1} parent=11 // pred_check_branch
          %208 = sbr.rel (%p206) target = $region16
        $region15: #{tpu_custom_call.1} parent=11 // pred_region
          _
        $region16: #{tpu_custom_call.1} parent=11 // pred_fallthru
          _
        // Predicated region
        $region17: #{tpu_custom_call.1} parent=11 // pred_check
          %p209 = pneg %p81
        $region18: #{tpu_custom_call.1} parent=11 // pred_check_branch
          %211 = sbr.rel (%p209) target = $region20
        $region19: #{tpu_custom_call.1} parent=11 // pred_region
          _
        $region20: #{tpu_custom_call.1} parent=11 // pred_fallthru
          _
        // Predicated region
        $region21: #{tpu_custom_call.1} parent=11 // pred_check
          %p212 = pneg %p102
        $region22: #{tpu_custom_call.1} parent=11 // pred_check_branch
          %214 = sbr.rel (%p212) target = $region24
        $region23: #{tpu_custom_call.1} parent=11 // pred_region
          _
        $region24: #{tpu_custom_call.1} parent=11 // pred_fallthru
          _
        // Predicated region
        $region25: #{tpu_custom_call.1} parent=11 // pred_check
          %p215 = pneg %p123
        $region26: #{tpu_custom_call.1} parent=11 // pred_check_branch
          %217 = sbr.rel (%p215) target = $region28
        $region27: #{tpu_custom_call.1} parent=11 // pred_region
          _
        $region28: #{tpu_custom_call.1} parent=11 // pred_fallthru
          _
        // Predicated region
        $region29: #{tpu_custom_call.1} parent=11 // pred_check
          %p218 = pneg %p144
        $region30: #{tpu_custom_call.1} parent=11 // pred_check_branch
          %220 = sbr.rel (%p218) target = $region32
        $region31: #{tpu_custom_call.1} parent=11 // pred_region
          _
        $region32: #{tpu_custom_call.1} parent=11 // pred_fallthru
          _
        // Predicated region
        $region33: #{tpu_custom_call.1} parent=11 // pred_check
          %p221 = pneg %p165
        $region34: #{tpu_custom_call.1} parent=11 // pred_check_branch
          %223 = sbr.rel (%p221) target = $region36
        $region35: #{tpu_custom_call.1} parent=11 // pred_region
          _
        $region36: #{tpu_custom_call.1} parent=11 // pred_fallthru
          _
      $region12: #{tpu_custom_call.1} parent=5 // pred_fallthru
        _
      %p224 = scmp.lt.s32.totalorder %s13, 2
      // Predicated region
      $region37: #{tpu_custom_call.1} parent=5 // pred_check
        %p225 = pneg %p224
      $region38: #{tpu_custom_call.1} parent=5 // pred_check_branch
        %227 = sbr.rel (%p225) target = $region40
      $region39: #{tpu_custom_call.1} parent=5 // pred_region
        // Predicated region
        $region41: #{tpu_custom_call.1} parent=39 // pred_check
          %p228 = pneg %p33
        $region42: #{tpu_custom_call.1} parent=39 // pred_check_branch
          %230 = sbr.rel (%p228) target = $region44
        $region43: #{tpu_custom_call.1} parent=39 // pred_region
          %s231 = smul.u32 32, %s13
          %s232 = ssub.s32 48, %s231
          %p233 = scmp.lt.s32.totalorder %s232, 32
          %s234 = scalar_select %p233, %s232, 32
          %s235 = smul.u32 8, %s234
          %p236 = scmp.lt.s32.totalorder %s231, 47
          %s237 = scalar_select %p236, %s231, 47
          %s238 = smul.addr %s237, 8
          %s239 = scalar_lea.vmem %s0, %s238
          %s240 = smul.u32 32, %s13
          %s241 = ssub.s32 48, %s240
          %p242 = scmp.lt.s32.totalorder %s241, 32
          %s243 = scalar_select %p242, %s241, 32
          %s244 = smul.u32 8, %s243
        $region44: #{tpu_custom_call.1} parent=39 // pred_fallthru
          _
      $region40: #{tpu_custom_call.1} parent=5 // pred_fallthru
        _
      %p245 = scmp.le.s32.totalorder 1, %s13
      %p246 = scmp.lt.s32.totalorder %s13, 3
      %p247 = pnand %p245, %p246
      %p248 = pneg %p247
      // Predicated region
      $region45: #{tpu_custom_call.1} parent=5 // pred_check
        _
      $region46: #{tpu_custom_call.1} parent=5 // pred_check_branch
        %250 = sbr.rel (%p247) target = $region48
      $region47: #{tpu_custom_call.1} parent=5 // pred_region
        %s251 = ssub.s32 %s13, 1
        %s252 = smul.u32 32, %s18
        %s253 = ssub.s32 48, %s252
        %p254 = scmp.lt.s32.totalorder %s253, 32
        %s255 = scalar_select %p254, %s253, 32
        %s256 = smul.u32 8, %s255
        %p257 = scmp.lt.s32.totalorder %s252, 47
        %s258 = scalar_select %p257, %s252, 47
        %s259 = smul.addr %s258, 8
        %s260 = scalar_lea.vmem %s0, %s259
        %p261 = pneg %p39
        %p262 = pneg %p36
        %p263 = pneg %p60
        %p264 = pneg %p57
        %p265 = pneg %p81
        %p266 = pneg %p78
        %p267 = pneg %p102
        %p268 = pneg %p99
        %p269 = pneg %p123
        %p270 = pneg %p120
        %p271 = pneg %p144
        %p272 = pneg %p141
        %p273 = pneg %p165
        %p274 = pneg %p162
        %p275 = pneg %p191
        %p276 = pneg %p188
        %s277 = sand.u32 %s178, 1
        %s278 = sand.u32 %s178, 1
        %s279 = smul.addr %s278, 256
        %s280 = scalar_lea.vmem [#allocation2], %s279
        %s281 = smul.u32 32, %s18
        %s282 = ssub.s32 48, %s281
        %p283 = scmp.lt.s32.totalorder %s282, 32
        %s284 = scalar_select %p283, %s282, 32
        %s285 = smul.u32 8, %s284
        %p286 = scmp.lt.s32.totalorder %s281, 47
        %s287 = scalar_select %p286, %s281, 47
        %s288 = smul.addr %s287, 8
        %s289 = scalar_lea.vmem %s0, %s288
        %s290 = smul.u32 32, %s18
        %s291 = ssub.s32 48, %s290
        %p292 = scmp.lt.s32.totalorder %s291, 32
        %s293 = scalar_select %p292, %s291, 32
        %s294 = smul.u32 8, %s293
        %s295 = smul.u32 32, %s18
        %s296 = ssub.s32 48, %s295
        %p297 = scmp.lt.s32.totalorder %s296, 32
        %s298 = scalar_select %p297, %s296, 32
        %s299 = smul.u32 8, %s298
        %v300 = vld [vmem:[%s289] sm:$0xff]
        %v301 = vld [vmem:[%s289 + $0x8] sm:$0xff]
        %v302 = vld [vmem:[%s289 + $0x10] sm:$0xff]
        %v303 = vld [vmem:[%s289 + $0x18] sm:$0xff]
        %v304 = vld [vmem:[%s289 + $0x20] sm:$0xff]
        %v305 = vld [vmem:[%s289 + $0x28] sm:$0xff]
        %v306 = vld [vmem:[%s289 + $0x30] sm:$0xff]
        %v307 = vld [vmem:[%s289 + $0x38] sm:$0xff]
        %v308 = vld [vmem:[%s289 + $0x40] sm:$0xff]
        %v309 = vld [vmem:[%s289 + $0x48] sm:$0xff]
        %v310 = vld [vmem:[%s289 + $0x50] sm:$0xff]
        %v311 = vld [vmem:[%s289 + $0x58] sm:$0xff]
        %v312 = vld [vmem:[%s289 + $0x60] sm:$0xff]
        %v313 = vld [vmem:[%s289 + $0x68] sm:$0xff]
        %v314 = vld [vmem:[%s289 + $0x70] sm:$0xff]
        %v315 = vld [vmem:[%s289 + $0x78] sm:$0xff]
        %v316 = vld [vmem:[%s289 + $0x80] sm:$0xff]
        %v317 = vld [vmem:[%s289 + $0x88] sm:$0xff]
        %v318 = vld [vmem:[%s289 + $0x90] sm:$0xff]
        %v319 = vld [vmem:[%s289 + $0x98] sm:$0xff]
        %v320 = vld [vmem:[%s289 + $0xa0] sm:$0xff]
        %v321 = vld [vmem:[%s289 + $0xa8] sm:$0xff]
        %v322 = vld [vmem:[%s289 + $0xb0] sm:$0xff]
        %v323 = vld [vmem:[%s289 + $0xb8] sm:$0xff]
        %v324 = vld [vmem:[%s289 + $0xc0] sm:$0xff]
        %v325 = vld [vmem:[%s289 + $0xc8] sm:$0xff]
        %v326 = vld [vmem:[%s289 + $0xd0] sm:$0xff]
        %v327 = vld [vmem:[%s289 + $0xd8] sm:$0xff]
        %v328 = vld [vmem:[%s289 + $0xe0] sm:$0xff]
        %v329 = vld [vmem:[%s289 + $0xe8] sm:$0xff]
        %v330 = vld [vmem:[%s289 + $0xf0] sm:$0xff]
        %v331 = vld [vmem:[%s289 + $0xf8] sm:$0xff]
        %v332 = vld [vmem:[%s1] sm:$0xff]
        %v333 = vld [vmem:[%s1 + $0x8] sm:$0xff]
        %v334 = vld [vmem:[%s1 + $0x10] sm:$0xff]
        %v335 = vld [vmem:[%s1 + $0x18] sm:$0xff]
        %v336 = vld [vmem:[%s2] sm:$0x1]
        %v338 = vperm.slane %v336, 0
        %vm340 = vcmask 261120
        %v342 = vsel %vm340, %v300, 0
        %v345 = vsel %vm340, %v301, 0
        %v348 = vsel %vm340, %v302, 0
        %v351 = vsel %vm340, %v303, 0
        %v354 = vsel %vm340, %v304, 0
        %v357 = vsel %vm340, %v305, 0
        %v360 = vsel %vm340, %v306, 0
        %v363 = vsel %vm340, %v307, 0
        %v366 = vsel %vm340, %v308, 0
        %v369 = vsel %vm340, %v309, 0
        %v372 = vsel %vm340, %v310, 0
        %v375 = vsel %vm340, %v311, 0
        %v378 = vsel %vm340, %v312, 0
        %v381 = vsel %vm340, %v313, 0
        %v384 = vsel %vm340, %v314, 0
        %v387 = vsel %vm340, %v315, 0
        %v390 = vsel %vm340, %v316, 0
        %v393 = vsel %vm340, %v317, 0
        %v396 = vsel %vm340, %v318, 0
        %v399 = vsel %vm340, %v319, 0
        %v402 = vsel %vm340, %v320, 0
        %v405 = vsel %vm340, %v321, 0
        %v408 = vsel %vm340, %v322, 0
        %v411 = vsel %vm340, %v323, 0
        %v414 = vsel %vm340, %v324, 0
        %v417 = vsel %vm340, %v325, 0
        %v420 = vsel %vm340, %v326, 0
        %v423 = vsel %vm340, %v327, 0
        %v426 = vsel %vm340, %v328, 0
        %v429 = vsel %vm340, %v329, 0
        %v432 = vsel %vm340, %v330, 0
        %v435 = vsel %vm340, %v331, 0
        %437 = vmatpush.msra.mxu0 0.0
        %438 = vmatpush.msra.mxu0 0.0
        %439 = vmatpush.msra.mxu0 0.0
        %440 = vmatpush.msra.mxu0 0.0
        %441 = vmatpush.msra.mxu0 0.0
        %442 = vmatpush.msra.mxu0 0.0
        %443 = vmatpush.msra.mxu0 0.0
        %444 = vmatpush.msra.mxu0 0.0
        %445 = vmatpush.msra.mxu0 0.0
        %446 = vmatpush.msra.mxu0 0.0
        %447 = vmatpush.msra.mxu0 0.0
        %448 = vmatpush.msra.mxu0 0.0
        %449 = vmatpush.msra.mxu0 %v335
        %450 = vmatpush.msra.mxu0 %v334
        %451 = vmatpush.msra.mxu0 %v333
        %452 = vmatpush.msra.mxu0 %v332
        %453 = vmatmul.f32.gmra.mxu0 %v342
        %v454 = vpop.f32.mrf.mxu0
        %v455 = vadd.f32 %v338, %v454
        %456 = vmatmul.f32.gmra.mxu0 %v345
        %v457 = vpop.f32.mrf.mxu0
        %v458 = vadd.f32 %v338, %v457
        %459 = vmatmul.f32.gmra.mxu0 %v348
        %v460 = vpop.f32.mrf.mxu0
        %v461 = vadd.f32 %v338, %v460
        %462 = vmatmul.f32.gmra.mxu0 %v351
        %v463 = vpop.f32.mrf.mxu0
        %v464 = vadd.f32 %v338, %v463
        %465 = vmatmul.f32.gmra.mxu0 %v354
        %v466 = vpop.f32.mrf.mxu0
        %v467 = vadd.f32 %v338, %v466
        %468 = vmatmul.f32.gmra.mxu0 %v357
        %v469 = vpop.f32.mrf.mxu0
        %v470 = vadd.f32 %v338, %v469
        %471 = vmatmul.f32.gmra.mxu0 %v360
        %v472 = vpop.f32.mrf.mxu0
        %v473 = vadd.f32 %v338, %v472
        %474 = vmatmul.f32.gmra.mxu0 %v363
        %v475 = vpop.f32.mrf.mxu0
        %v476 = vadd.f32 %v338, %v475
        %477 = vmatmul.f32.gmra.mxu0 %v366
        %v478 = vpop.f32.mrf.mxu0
        %v479 = vadd.f32 %v338, %v478
        %480 = vmatmul.f32.gmra.mxu0 %v369
        %v481 = vpop.f32.mrf.mxu0
        %v482 = vadd.f32 %v338, %v481
        %483 = vmatmul.f32.gmra.mxu0 %v372
        %v484 = vpop.f32.mrf.mxu0
        %v485 = vadd.f32 %v338, %v484
        %486 = vmatmul.f32.gmra.mxu0 %v375
        %v487 = vpop.f32.mrf.mxu0
        %v488 = vadd.f32 %v338, %v487
        %489 = vmatmul.f32.gmra.mxu0 %v378
        %v490 = vpop.f32.mrf.mxu0
        %v491 = vadd.f32 %v338, %v490
        %492 = vmatmul.f32.gmra.mxu0 %v381
        %v493 = vpop.f32.mrf.mxu0
        %v494 = vadd.f32 %v338, %v493
        %495 = vmatmul.f32.gmra.mxu0 %v384
        %v496 = vpop.f32.mrf.mxu0
        %v497 = vadd.f32 %v338, %v496
        %498 = vmatmul.f32.gmra.mxu0 %v387
        %v499 = vpop.f32.mrf.mxu0
        %v500 = vadd.f32 %v338, %v499
        %501 = vmatmul.f32.gmra.mxu0 %v390
        %v502 = vpop.f32.mrf.mxu0
        %v503 = vadd.f32 %v338, %v502
        %504 = vmatmul.f32.gmra.mxu0 %v393
        %v505 = vpop.f32.mrf.mxu0
        %v506 = vadd.f32 %v338, %v505
        %507 = vmatmul.f32.gmra.mxu0 %v396
        %v508 = vpop.f32.mrf.mxu0
        %v509 = vadd.f32 %v338, %v508
        %510 = vmatmul.f32.gmra.mxu0 %v399
        %v511 = vpop.f32.mrf.mxu0
        %v512 = vadd.f32 %v338, %v511
        %513 = vmatmul.f32.gmra.mxu0 %v402
        %v514 = vpop.f32.mrf.mxu0
        %v515 = vadd.f32 %v338, %v514
        %516 = vmatmul.f32.gmra.mxu0 %v405
        %v517 = vpop.f32.mrf.mxu0
        %v518 = vadd.f32 %v338, %v517
        %519 = vmatmul.f32.gmra.mxu0 %v408
        %v520 = vpop.f32.mrf.mxu0
        %v521 = vadd.f32 %v338, %v520
        %522 = vmatmul.f32.gmra.mxu0 %v411
        %v523 = vpop.f32.mrf.mxu0
        %v524 = vadd.f32 %v338, %v523
        %525 = vmatmul.f32.gmra.mxu0 %v414
        %v526 = vpop.f32.mrf.mxu0
        %v527 = vadd.f32 %v338, %v526
        %528 = vmatmul.f32.gmra.mxu0 %v417
        %v529 = vpop.f32.mrf.mxu0
        %v530 = vadd.f32 %v338, %v529
        %531 = vmatmul.f32.gmra.mxu0 %v420
        %v532 = vpop.f32.mrf.mxu0
        %v533 = vadd.f32 %v338, %v532
        %534 = vmatmul.f32.gmra.mxu0 %v423
        %v535 = vpop.f32.mrf.mxu0
        %v536 = vadd.f32 %v338, %v535
        %537 = vmatmul.f32.gmra.mxu0 %v426
        %v538 = vpop.f32.mrf.mxu0
        %v539 = vadd.f32 %v338, %v538
        %540 = vmatmul.f32.gmra.mxu0 %v429
        %v541 = vpop.f32.mrf.mxu0
        %v542 = vadd.f32 %v338, %v541
        %543 = vmatmul.f32.gmra.mxu0 %v432
        %v544 = vpop.f32.mrf.mxu0
        %v545 = vadd.f32 %v338, %v544
        %546 = vmatmul.f32.gmra.mxu0 %v435
        %v547 = vpop.f32.mrf.mxu0
        %v548 = vadd.f32 %v338, %v547
        %549 = vdwg.mxu0
        %v550 = vmax.f32 %v455, 0.0
        %v551 = vmax.f32 %v458, 0.0
        %v552 = vmax.f32 %v461, 0.0
        %v553 = vmax.f32 %v464, 0.0
        %v554 = vmax.f32 %v467, 0.0
        %v555 = vmax.f32 %v470, 0.0
        %v556 = vmax.f32 %v473, 0.0
        %v557 = vmax.f32 %v476, 0.0
        %v558 = vmax.f32 %v479, 0.0
        %v559 = vmax.f32 %v482, 0.0
        %v560 = vmax.f32 %v485, 0.0
        %v561 = vmax.f32 %v488, 0.0
        %v562 = vmax.f32 %v491, 0.0
        %v563 = vmax.f32 %v494, 0.0
        %v564 = vmax.f32 %v497, 0.0
        %v565 = vmax.f32 %v500, 0.0
        %v566 = vmax.f32 %v503, 0.0
        %v567 = vmax.f32 %v506, 0.0
        %v568 = vmax.f32 %v509, 0.0
        %v569 = vmax.f32 %v512, 0.0
        %v570 = vmax.f32 %v515, 0.0
        %v571 = vmax.f32 %v518, 0.0
        %v572 = vmax.f32 %v521, 0.0
        %v573 = vmax.f32 %v524, 0.0
        %v574 = vmax.f32 %v527, 0.0
        %v575 = vmax.f32 %v530, 0.0
        %v576 = vmax.f32 %v533, 0.0
        %v577 = vmax.f32 %v536, 0.0
        %v578 = vmax.f32 %v539, 0.0
        %v579 = vmax.f32 %v542, 0.0
        %v580 = vmax.f32 %v545, 0.0
        %v581 = vmax.f32 %v548, 0.0
        %v582 = vld [vmem:[%s3] sm:$0xff]
        %v583 = vld [vmem:[%s3 + $0x8] sm:$0xff]
        %v584 = vld [vmem:[%s3 + $0x10] sm:$0xff]
        %v585 = vld [vmem:[%s3 + $0x18] sm:$0xff]
        %v586 = vld [vmem:[%s3 + $0x20] sm:$0xff]
        %v587 = vld [vmem:[%s3 + $0x28] sm:$0xff]
        %v588 = vld [vmem:[%s3 + $0x30] sm:$0xff]
        %v589 = vld [vmem:[%s3 + $0x38] sm:$0xff]
        %v590 = vld [vmem:[%s3 + $0x40] sm:$0xff]
        %v591 = vld [vmem:[%s3 + $0x48] sm:$0xff]
        %v592 = vld [vmem:[%s3 + $0x50] sm:$0xff]
        %v593 = vld [vmem:[%s3 + $0x58] sm:$0xff]
        %v594 = vld [vmem:[%s3 + $0x60] sm:$0xff]
        %v595 = vld [vmem:[%s3 + $0x68] sm:$0xff]
        %v596 = vld [vmem:[%s3 + $0x70] sm:$0xff]
        %v597 = vld [vmem:[%s3 + $0x78] sm:$0xff]
        %v598 = vld [vmem:[%s4] sm:$0x1]
        %v600 = vperm.slane %v598, 0
        %602 = vmatpush.msra.mxu0 %v597
        %603 = vmatpush.msra.mxu0 %v596
        %604 = vmatpush.msra.mxu0 %v595
        %605 = vmatpush.msra.mxu0 %v594
        %606 = vmatpush.msra.mxu0 %v593
        %607 = vmatpush.msra.mxu0 %v592
        %608 = vmatpush.msra.mxu0 %v591
        %609 = vmatpush.msra.mxu0 %v590
        %610 = vmatpush.msra.mxu0 %v589
        %611 = vmatpush.msra.mxu0 %v588
        %612 = vmatpush.msra.mxu0 %v587
        %613 = vmatpush.msra.mxu0 %v586
        %614 = vmatpush.msra.mxu0 %v585
        %615 = vmatpush.msra.mxu0 %v584
        %616 = vmatpush.msra.mxu0 %v583
        %617 = vmatpush.msra.mxu0 %v582
        %618 = vmatmul.f32.gmra.mxu0 %v550
        %v619 = vpop.f32.mrf.mxu0
        %v620 = vadd.f32 %v600, %v619
        %621 = vmatmul.f32.gmra.mxu0 %v551
        %v622 = vpop.f32.mrf.mxu0
        %v623 = vadd.f32 %v600, %v622
        %624 = vmatmul.f32.gmra.mxu0 %v552
        %v625 = vpop.f32.mrf.mxu0
        %v626 = vadd.f32 %v600, %v625
        %627 = vmatmul.f32.gmra.mxu0 %v553
        %v628 = vpop.f32.mrf.mxu0
        %v629 = vadd.f32 %v600, %v628
        %630 = vmatmul.f32.gmra.mxu0 %v554
        %v631 = vpop.f32.mrf.mxu0
        %v632 = vadd.f32 %v600, %v631
        %633 = vmatmul.f32.gmra.mxu0 %v555
        %v634 = vpop.f32.mrf.mxu0
        %v635 = vadd.f32 %v600, %v634
        %636 = vmatmul.f32.gmra.mxu0 %v556
        %v637 = vpop.f32.mrf.mxu0
        %v638 = vadd.f32 %v600, %v637
        %639 = vmatmul.f32.gmra.mxu0 %v557
        %v640 = vpop.f32.mrf.mxu0
        %v641 = vadd.f32 %v600, %v640
        %642 = vmatmul.f32.gmra.mxu0 %v558
        %v643 = vpop.f32.mrf.mxu0
        %v644 = vadd.f32 %v600, %v643
        %645 = vmatmul.f32.gmra.mxu0 %v559
        %v646 = vpop.f32.mrf.mxu0
        %v647 = vadd.f32 %v600, %v646
        %648 = vmatmul.f32.gmra.mxu0 %v560
        %v649 = vpop.f32.mrf.mxu0
        %v650 = vadd.f32 %v600, %v649
        %651 = vmatmul.f32.gmra.mxu0 %v561
        %v652 = vpop.f32.mrf.mxu0
        %v653 = vadd.f32 %v600, %v652
        %654 = vmatmul.f32.gmra.mxu0 %v562
        %v655 = vpop.f32.mrf.mxu0
        %v656 = vadd.f32 %v600, %v655
        %657 = vmatmul.f32.gmra.mxu0 %v563
        %v658 = vpop.f32.mrf.mxu0
        %v659 = vadd.f32 %v600, %v658
        %660 = vmatmul.f32.gmra.mxu0 %v564
        %v661 = vpop.f32.mrf.mxu0
        %v662 = vadd.f32 %v600, %v661
        %663 = vmatmul.f32.gmra.mxu0 %v565
        %v664 = vpop.f32.mrf.mxu0
        %v665 = vadd.f32 %v600, %v664
        %666 = vmatmul.f32.gmra.mxu0 %v566
        %v667 = vpop.f32.mrf.mxu0
        %v668 = vadd.f32 %v600, %v667
        %669 = vmatmul.f32.gmra.mxu0 %v567
        %v670 = vpop.f32.mrf.mxu0
        %v671 = vadd.f32 %v600, %v670
        %672 = vmatmul.f32.gmra.mxu0 %v568
        %v673 = vpop.f32.mrf.mxu0
        %v674 = vadd.f32 %v600, %v673
        %675 = vmatmul.f32.gmra.mxu0 %v569
        %v676 = vpop.f32.mrf.mxu0
        %v677 = vadd.f32 %v600, %v676
        %678 = vmatmul.f32.gmra.mxu0 %v570
        %v679 = vpop.f32.mrf.mxu0
        %v680 = vadd.f32 %v600, %v679
        %681 = vmatmul.f32.gmra.mxu0 %v571
        %v682 = vpop.f32.mrf.mxu0
        %v683 = vadd.f32 %v600, %v682
        %684 = vmatmul.f32.gmra.mxu0 %v572
        %v685 = vpop.f32.mrf.mxu0
        %v686 = vadd.f32 %v600, %v685
        %687 = vmatmul.f32.gmra.mxu0 %v573
        %v688 = vpop.f32.mrf.mxu0
        %v689 = vadd.f32 %v600, %v688
        %690 = vmatmul.f32.gmra.mxu0 %v574
        %v691 = vpop.f32.mrf.mxu0
        %v692 = vadd.f32 %v600, %v691
        %693 = vmatmul.f32.gmra.mxu0 %v575
        %v694 = vpop.f32.mrf.mxu0
        %v695 = vadd.f32 %v600, %v694
        %696 = vmatmul.f32.gmra.mxu0 %v576
        %v697 = vpop.f32.mrf.mxu0
        %v698 = vadd.f32 %v600, %v697
        %699 = vmatmul.f32.gmra.mxu0 %v577
        %v700 = vpop.f32.mrf.mxu0
        %v701 = vadd.f32 %v600, %v700
        %702 = vmatmul.f32.gmra.mxu0 %v578
        %v703 = vpop.f32.mrf.mxu0
        %v704 = vadd.f32 %v600, %v703
        %705 = vmatmul.f32.gmra.mxu0 %v579
        %v706 = vpop.f32.mrf.mxu0
        %v707 = vadd.f32 %v600, %v706
        %708 = vmatmul.f32.gmra.mxu0 %v580
        %v709 = vpop.f32.mrf.mxu0
        %v710 = vadd.f32 %v600, %v709
        %711 = vmatmul.f32.gmra.mxu0 %v581
        %v712 = vpop.f32.mrf.mxu0
        %v713 = vadd.f32 %v600, %v712
        %714 = vdwg.mxu0
        %v715 = vmax.f32 %v620, 0.0
        %v716 = vmax.f32 %v623, 0.0
        %v717 = vmax.f32 %v626, 0.0
        %v718 = vmax.f32 %v629, 0.0
        %v719 = vmax.f32 %v632, 0.0
        %v720 = vmax.f32 %v635, 0.0
        %v721 = vmax.f32 %v638, 0.0
        %v722 = vmax.f32 %v641, 0.0
        %v723 = vmax.f32 %v644, 0.0
        %v724 = vmax.f32 %v647, 0.0
        %v725 = vmax.f32 %v650, 0.0
        %v726 = vmax.f32 %v653, 0.0
        %v727 = vmax.f32 %v656, 0.0
        %v728 = vmax.f32 %v659, 0.0
        %v729 = vmax.f32 %v662, 0.0
        %v730 = vmax.f32 %v665, 0.0
        %v731 = vmax.f32 %v668, 0.0
        %v732 = vmax.f32 %v671, 0.0
        %v733 = vmax.f32 %v674, 0.0
        %v734 = vmax.f32 %v677, 0.0
        %v735 = vmax.f32 %v680, 0.0
        %v736 = vmax.f32 %v683, 0.0
        %v737 = vmax.f32 %v686, 0.0
        %v738 = vmax.f32 %v689, 0.0
        %v739 = vmax.f32 %v692, 0.0
        %v740 = vmax.f32 %v695, 0.0
        %v741 = vmax.f32 %v698, 0.0
        %v742 = vmax.f32 %v701, 0.0
        %v743 = vmax.f32 %v704, 0.0
        %v744 = vmax.f32 %v707, 0.0
        %v745 = vmax.f32 %v710, 0.0
        %v746 = vmax.f32 %v713, 0.0
        %v747 = vld [vmem:[%s5] sm:$0xff]
        %v748 = vld [vmem:[%s5 + $0x8] sm:$0xff]
        %v749 = vld [vmem:[%s5 + $0x10] sm:$0xff]
        %v750 = vld [vmem:[%s5 + $0x18] sm:$0xff]
        %v751 = vld [vmem:[%s5 + $0x20] sm:$0xff]
        %v752 = vld [vmem:[%s5 + $0x28] sm:$0xff]
        %v753 = vld [vmem:[%s5 + $0x30] sm:$0xff]
        %v754 = vld [vmem:[%s5 + $0x38] sm:$0xff]
        %v755 = vld [vmem:[%s6] sm:$0x1]
        %v757 = vperm.slane %v755, 0
        %vm759 = vcmask 523264
        %v761 = vsel %vm759, %v715, 0
        %v764 = vsel %vm759, %v716, 0
        %v767 = vsel %vm759, %v717, 0
        %v770 = vsel %vm759, %v718, 0
        %v773 = vsel %vm759, %v719, 0
        %v776 = vsel %vm759, %v720, 0
        %v779 = vsel %vm759, %v721, 0
        %v782 = vsel %vm759, %v722, 0
        %v785 = vsel %vm759, %v723, 0
        %v788 = vsel %vm759, %v724, 0
        %v791 = vsel %vm759, %v725, 0
        %v794 = vsel %vm759, %v726, 0
        %v797 = vsel %vm759, %v727, 0
        %v800 = vsel %vm759, %v728, 0
        %v803 = vsel %vm759, %v729, 0
        %v806 = vsel %vm759, %v730, 0
        %v809 = vsel %vm759, %v731, 0
        %v812 = vsel %vm759, %v732, 0
        %v815 = vsel %vm759, %v733, 0
        %v818 = vsel %vm759, %v734, 0
        %v821 = vsel %vm759, %v735, 0
        %v824 = vsel %vm759, %v736, 0
        %v827 = vsel %vm759, %v737, 0
        %v830 = vsel %vm759, %v738, 0
        %v833 = vsel %vm759, %v739, 0
        %v836 = vsel %vm759, %v740, 0
        %v839 = vsel %vm759, %v741, 0
        %v842 = vsel %vm759, %v742, 0
        %v845 = vsel %vm759, %v743, 0
        %v848 = vsel %vm759, %v744, 0
        %v851 = vsel %vm759, %v745, 0
        %v854 = vsel %vm759, %v746, 0
        %856 = vmatpush.msra.mxu0 0.0
        %857 = vmatpush.msra.mxu0 0.0
        %858 = vmatpush.msra.mxu0 0.0
        %859 = vmatpush.msra.mxu0 0.0
        %860 = vmatpush.msra.mxu0 0.0
        %861 = vmatpush.msra.mxu0 0.0
        %862 = vmatpush.msra.mxu0 0.0
        %863 = vmatpush.msra.mxu0 0.0
        %864 = vmatpush.msra.mxu0 %v754
        %865 = vmatpush.msra.mxu0 %v753
        %866 = vmatpush.msra.mxu0 %v752
        %867 = vmatpush.msra.mxu0 %v751
        %868 = vmatpush.msra.mxu0 %v750
        %869 = vmatpush.msra.mxu0 %v749
        %870 = vmatpush.msra.mxu0 %v748
        %871 = vmatpush.msra.mxu0 %v747
        %872 = vmatmul.f32.gmra.mxu0 %v761
        %v873 = vpop.f32.mrf.mxu0
        %v874 = vadd.f32 %v757, %v873
        %875 = vmatmul.f32.gmra.mxu0 %v764
        %v876 = vpop.f32.mrf.mxu0
        %v877 = vadd.f32 %v757, %v876
        %878 = vmatmul.f32.gmra.mxu0 %v767
        %v879 = vpop.f32.mrf.mxu0
        %v880 = vadd.f32 %v757, %v879
        %881 = vmatmul.f32.gmra.mxu0 %v770
        %v882 = vpop.f32.mrf.mxu0
        %v883 = vadd.f32 %v757, %v882
        %884 = vmatmul.f32.gmra.mxu0 %v773
        %v885 = vpop.f32.mrf.mxu0
        %v886 = vadd.f32 %v757, %v885
        %887 = vmatmul.f32.gmra.mxu0 %v776
        %v888 = vpop.f32.mrf.mxu0
        %v889 = vadd.f32 %v757, %v888
        %890 = vmatmul.f32.gmra.mxu0 %v779
        %v891 = vpop.f32.mrf.mxu0
        %v892 = vadd.f32 %v757, %v891
        %893 = vmatmul.f32.gmra.mxu0 %v782
        %v894 = vpop.f32.mrf.mxu0
        %v895 = vadd.f32 %v757, %v894
        %896 = vmatmul.f32.gmra.mxu0 %v785
        %v897 = vpop.f32.mrf.mxu0
        %v898 = vadd.f32 %v757, %v897
        %899 = vmatmul.f32.gmra.mxu0 %v788
        %v900 = vpop.f32.mrf.mxu0
        %v901 = vadd.f32 %v757, %v900
        %902 = vmatmul.f32.gmra.mxu0 %v791
        %v903 = vpop.f32.mrf.mxu0
        %v904 = vadd.f32 %v757, %v903
        %905 = vmatmul.f32.gmra.mxu0 %v794
        %v906 = vpop.f32.mrf.mxu0
        %v907 = vadd.f32 %v757, %v906
        %908 = vmatmul.f32.gmra.mxu0 %v797
        %v909 = vpop.f32.mrf.mxu0
        %v910 = vadd.f32 %v757, %v909
        %911 = vmatmul.f32.gmra.mxu0 %v800
        %v912 = vpop.f32.mrf.mxu0
        %v913 = vadd.f32 %v757, %v912
        %914 = vmatmul.f32.gmra.mxu0 %v803
        %v915 = vpop.f32.mrf.mxu0
        %v916 = vadd.f32 %v757, %v915
        %917 = vmatmul.f32.gmra.mxu0 %v806
        %v918 = vpop.f32.mrf.mxu0
        %v919 = vadd.f32 %v757, %v918
        %920 = vmatmul.f32.gmra.mxu0 %v809
        %v921 = vpop.f32.mrf.mxu0
        %v922 = vadd.f32 %v757, %v921
        %923 = vmatmul.f32.gmra.mxu0 %v812
        %v924 = vpop.f32.mrf.mxu0
        %v925 = vadd.f32 %v757, %v924
        %926 = vmatmul.f32.gmra.mxu0 %v815
        %v927 = vpop.f32.mrf.mxu0
        %v928 = vadd.f32 %v757, %v927
        %929 = vmatmul.f32.gmra.mxu0 %v818
        %v930 = vpop.f32.mrf.mxu0
        %v931 = vadd.f32 %v757, %v930
        %932 = vmatmul.f32.gmra.mxu0 %v821
        %v933 = vpop.f32.mrf.mxu0
        %v934 = vadd.f32 %v757, %v933
        %935 = vmatmul.f32.gmra.mxu0 %v824
        %v936 = vpop.f32.mrf.mxu0
        %v937 = vadd.f32 %v757, %v936
        %938 = vmatmul.f32.gmra.mxu0 %v827
        %v939 = vpop.f32.mrf.mxu0
        %v940 = vadd.f32 %v757, %v939
        %941 = vmatmul.f32.gmra.mxu0 %v830
        %v942 = vpop.f32.mrf.mxu0
        %v943 = vadd.f32 %v757, %v942
        %944 = vmatmul.f32.gmra.mxu0 %v833
        %v945 = vpop.f32.mrf.mxu0
        %v946 = vadd.f32 %v757, %v945
        %947 = vmatmul.f32.gmra.mxu0 %v836
        %v948 = vpop.f32.mrf.mxu0
        %v949 = vadd.f32 %v757, %v948
        %950 = vmatmul.f32.gmra.mxu0 %v839
        %v951 = vpop.f32.mrf.mxu0
        %v952 = vadd.f32 %v757, %v951
        %953 = vmatmul.f32.gmra.mxu0 %v842
        %v954 = vpop.f32.mrf.mxu0
        %v955 = vadd.f32 %v757, %v954
        %956 = vmatmul.f32.gmra.mxu0 %v845
        %v957 = vpop.f32.mrf.mxu0
        %v958 = vadd.f32 %v757, %v957
        %959 = vmatmul.f32.gmra.mxu0 %v848
        %v960 = vpop.f32.mrf.mxu0
        %v961 = vadd.f32 %v757, %v960
        %962 = vmatmul.f32.gmra.mxu0 %v851
        %v963 = vpop.f32.mrf.mxu0
        %v964 = vadd.f32 %v757, %v963
        %965 = vmatmul.f32.gmra.mxu0 %v854
        %v966 = vpop.f32.mrf.mxu0
        %v967 = vadd.f32 %v757, %v966
        %968 = vdwg.mxu0
        %v969 = vmax.f32 %v874, 0.0
        %v970 = vmax.f32 %v877, 0.0
        %v971 = vmax.f32 %v880, 0.0
        %v972 = vmax.f32 %v883, 0.0
        %v973 = vmax.f32 %v886, 0.0
        %v974 = vmax.f32 %v889, 0.0
        %v975 = vmax.f32 %v892, 0.0
        %v976 = vmax.f32 %v895, 0.0
        %v977 = vmax.f32 %v898, 0.0
        %v978 = vmax.f32 %v901, 0.0
        %v979 = vmax.f32 %v904, 0.0
        %v980 = vmax.f32 %v907, 0.0
        %v981 = vmax.f32 %v910, 0.0
        %v982 = vmax.f32 %v913, 0.0
        %v983 = vmax.f32 %v916, 0.0
        %v984 = vmax.f32 %v919, 0.0
        %v985 = vmax.f32 %v922, 0.0
        %v986 = vmax.f32 %v925, 0.0
        %v987 = vmax.f32 %v928, 0.0
        %v988 = vmax.f32 %v931, 0.0
        %v989 = vmax.f32 %v934, 0.0
        %v990 = vmax.f32 %v937, 0.0
        %v991 = vmax.f32 %v940, 0.0
        %v992 = vmax.f32 %v943, 0.0
        %v993 = vmax.f32 %v946, 0.0
        %v994 = vmax.f32 %v949, 0.0
        %v995 = vmax.f32 %v952, 0.0
        %v996 = vmax.f32 %v955, 0.0
        %v997 = vmax.f32 %v958, 0.0
        %v998 = vmax.f32 %v961, 0.0
        %v999 = vmax.f32 %v964, 0.0
        %v1000 = vmax.f32 %v967, 0.0
        %vm1001 = vcmask 130048
        %1002 = vst.msk [vmem:[%s280] sm:$0xff] %vm1001, %v969
        %1003 = vst.msk [vmem:[%s280 + $0x8] sm:$0xff] %vm1001, %v970
        %1004 = vst.msk [vmem:[%s280 + $0x10] sm:$0xff] %vm1001, %v971
        %1005 = vst.msk [vmem:[%s280 + $0x18] sm:$0xff] %vm1001, %v972
        %1006 = vst.msk [vmem:[%s280 + $0x20] sm:$0xff] %vm1001, %v973
        %1007 = vst.msk [vmem:[%s280 + $0x28] sm:$0xff] %vm1001, %v974
        %1008 = vst.msk [vmem:[%s280 + $0x30] sm:$0xff] %vm1001, %v975
        %1009 = vst.msk [vmem:[%s280 + $0x38] sm:$0xff] %vm1001, %v976
        %1010 = vst.msk [vmem:[%s280 + $0x40] sm:$0xff] %vm1001, %v977
        %1011 = vst.msk [vmem:[%s280 + $0x48] sm:$0xff] %vm1001, %v978
        %1012 = vst.msk [vmem:[%s280 + $0x50] sm:$0xff] %vm1001, %v979
        %1013 = vst.msk [vmem:[%s280 + $0x58] sm:$0xff] %vm1001, %v980
        %1014 = vst.msk [vmem:[%s280 + $0x60] sm:$0xff] %vm1001, %v981
        %1015 = vst.msk [vmem:[%s280 + $0x68] sm:$0xff] %vm1001, %v982
        %1016 = vst.msk [vmem:[%s280 + $0x70] sm:$0xff] %vm1001, %v983
        %1017 = vst.msk [vmem:[%s280 + $0x78] sm:$0xff] %vm1001, %v984
        %1018 = vst.msk [vmem:[%s280 + $0x80] sm:$0xff] %vm1001, %v985
        %1019 = vst.msk [vmem:[%s280 + $0x88] sm:$0xff] %vm1001, %v986
        %1020 = vst.msk [vmem:[%s280 + $0x90] sm:$0xff] %vm1001, %v987
        %1021 = vst.msk [vmem:[%s280 + $0x98] sm:$0xff] %vm1001, %v988
        %1022 = vst.msk [vmem:[%s280 + $0xa0] sm:$0xff] %vm1001, %v989
        %1023 = vst.msk [vmem:[%s280 + $0xa8] sm:$0xff] %vm1001, %v990
        %1024 = vst.msk [vmem:[%s280 + $0xb0] sm:$0xff] %vm1001, %v991
        %1025 = vst.msk [vmem:[%s280 + $0xb8] sm:$0xff] %vm1001, %v992
        %1026 = vst.msk [vmem:[%s280 + $0xc0] sm:$0xff] %vm1001, %v993
        %1027 = vst.msk [vmem:[%s280 + $0xc8] sm:$0xff] %vm1001, %v994
        %1028 = vst.msk [vmem:[%s280 + $0xd0] sm:$0xff] %vm1001, %v995
        %1029 = vst.msk [vmem:[%s280 + $0xd8] sm:$0xff] %vm1001, %v996
        %1030 = vst.msk [vmem:[%s280 + $0xe0] sm:$0xff] %vm1001, %v997
        %1031 = vst.msk [vmem:[%s280 + $0xe8] sm:$0xff] %vm1001, %v998
        %1032 = vst.msk [vmem:[%s280 + $0xf0] sm:$0xff] %vm1001, %v999
        %1033 = vst.msk [vmem:[%s280 + $0xf8] sm:$0xff] %vm1001, %v1000
        %s1034 = sand.u32 %s178, 1
        %s1035 = sand.u32 %s178, 1
        %s1036 = smul.addr %s1035, 256
        %s1037 = scalar_lea.vmem [#allocation2], %s1036
        // Predicated region
        $region49: #{tpu_custom_call.1} parent=47 // pred_check
          %p1038 = pneg %p188
        $region50: #{tpu_custom_call.1} parent=47 // pred_check_branch
          %1040 = sbr.rel (%p1038) target = $region52
        $region51: #{tpu_custom_call.1} parent=47 // pred_region
          %s1041 = smul.u32 32, %s18
          %s1042 = ssub.s32 48, %s1041
          %p1043 = scmp.lt.s32.totalorder %s1042, 32
          %s1044 = scalar_select %p1043, %s1042, 32
          %s1045 = smul.u32 8, %s1044
          %p1046 = scmp.ne.s32.totalorder 0, %s1045
          %s1047 = smul.addr %s1041, 8
          %s1048 = scalar_lea.vmem %s7, %s1047
          // Predicated region
          $region53: #{tpu_custom_call.1} parent=51 // pred_check
            %p1049 = pneg %p1046
          $region54: #{tpu_custom_call.1} parent=51 // pred_check_branch
            %1051 = sbr.rel (%p1049) target = $region56
          $region55: #{tpu_custom_call.1} parent=51 // pred_region
            // Predicated region
            $region57: #{tpu_custom_call.1} parent=55 // pred_check
              _
            $region58: #{tpu_custom_call.1} parent=55 // pred_check_branch
              %1053 = sbr.rel (0) target = $region60
            $region59: #{tpu_custom_call.1} parent=55 // pred_region
              // Predicated region
              $region79: #{tpu_custom_call.1} parent=59 // pred_check
                _
              $region80: #{tpu_custom_call.1} parent=59 // pred_check_branch
                %1165 = sbr.rel (0) target = $region82
              $region81: #{tpu_custom_call.1} parent=59 // pred_region
                %s1166 = sshrl.u32 %s1044, 5
                // While loop
                $region83: #{tpu_custom_call.1} parent=81 // loop_pre_header
                  _
                $region84: #{tpu_custom_call.1} parent=81 // loop_header
                  %s1168 = sphi 0, %s1170
                  %p1169 = scmp.ge.s32.totalorder %s1168, %s1166
                  %s1173 = sphi 0, %s1242
                  %s1174 = sphi %s1037, %s1245
                  %s1175 = sphi %s1048, %s1246
                $region85: #{tpu_custom_call.1} parent=81 // loop_header_branch
                  %1172 = sbr.rel (%p1169) target = $region89
                $region86: #{tpu_custom_call.1} parent=81 // loop_body
                  %v1176 = vld [vmem:[%s1174] sm:$0xff]
                  %1177 = vst [vmem:[%s1175] sm:$0xff] %v1176
                  %v1178 = vld [vmem:[%s1174 + $0x8] sm:$0xff]
                  %1179 = vst [vmem:[%s1175 + $0x8] sm:$0xff] %v1178
                  %v1180 = vld [vmem:[%s1174 + $0x10] sm:$0xff]
                  %1181 = vst [vmem:[%s1175 + $0x10] sm:$0xff] %v1180
                  %v1182 = vld [vmem:[%s1174 + $0x18] sm:$0xff]
                  %1183 = vst [vmem:[%s1175 + $0x18] sm:$0xff] %v1182
                  %v1184 = vld [vmem:[%s1174 + $0x20] sm:$0xff]
                  %1185 = vst [vmem:[%s1175 + $0x20] sm:$0xff] %v1184
                  %v1186 = vld [vmem:[%s1174 + $0x28] sm:$0xff]
                  %1187 = vst [vmem:[%s1175 + $0x28] sm:$0xff] %v1186
                  %v1188 = vld [vmem:[%s1174 + $0x30] sm:$0xff]
                  %1189 = vst [vmem:[%s1175 + $0x30] sm:$0xff] %v1188
                  %v1190 = vld [vmem:[%s1174 + $0x38] sm:$0xff]
                  %1191 = vst [vmem:[%s1175 + $0x38] sm:$0xff] %v1190
                  %v1192 = vld [vmem:[%s1174 + $0x40] sm:$0xff]
                  %1193 = vst [vmem:[%s1175 + $0x40] sm:$0xff] %v1192
                  %v1194 = vld [vmem:[%s1174 + $0x48] sm:$0xff]
                  %1195 = vst [vmem:[%s1175 + $0x48] sm:$0xff] %v1194
                  %v1196 = vld [vmem:[%s1174 + $0x50] sm:$0xff]
                  %1197 = vst [vmem:[%s1175 + $0x50] sm:$0xff] %v1196
                  %v1198 = vld [vmem:[%s1174 + $0x58] sm:$0xff]
                  %1199 = vst [vmem:[%s1175 + $0x58] sm:$0xff] %v1198
                  %v1200 = vld [vmem:[%s1174 + $0x60] sm:$0xff]
                  %1201 = vst [vmem:[%s1175 + $0x60] sm:$0xff] %v1200
                  %v1202 = vld [vmem:[%s1174 + $0x68] sm:$0xff]
                  %1203 = vst [vmem:[%s1175 + $0x68] sm:$0xff] %v1202
                  %v1204 = vld [vmem:[%s1174 + $0x70] sm:$0xff]
                  %1205 = vst [vmem:[%s1175 + $0x70] sm:$0xff] %v1204
                  %v1206 = vld [vmem:[%s1174 + $0x78] sm:$0xff]
                  %1207 = vst [vmem:[%s1175 + $0x78] sm:$0xff] %v1206
                  %v1208 = vld [vmem:[%s1174 + $0x80] sm:$0xff]
                  %1209 = vst [vmem:[%s1175 + $0x80] sm:$0xff] %v1208
                  %v1210 = vld [vmem:[%s1174 + $0x88] sm:$0xff]
                  %1211 = vst [vmem:[%s1175 + $0x88] sm:$0xff] %v1210
                  %v1212 = vld [vmem:[%s1174 + $0x90] sm:$0xff]
                  %1213 = vst [vmem:[%s1175 + $0x90] sm:$0xff] %v1212
                  %v1214 = vld [vmem:[%s1174 + $0x98] sm:$0xff]
                  %1215 = vst [vmem:[%s1175 + $0x98] sm:$0xff] %v1214
                  %v1216 = vld [vmem:[%s1174 + $0xa0] sm:$0xff]
                  %1217 = vst [vmem:[%s1175 + $0xa0] sm:$0xff] %v1216
                  %v1218 = vld [vmem:[%s1174 + $0xa8] sm:$0xff]
                  %1219 = vst [vmem:[%s1175 + $0xa8] sm:$0xff] %v1218
                  %v1220 = vld [vmem:[%s1174 + $0xb0] sm:$0xff]
                  %1221 = vst [vmem:[%s1175 + $0xb0] sm:$0xff] %v1220
                  %v1222 = vld [vmem:[%s1174 + $0xb8] sm:$0xff]
                  %1223 = vst [vmem:[%s1175 + $0xb8] sm:$0xff] %v1222
                  %v1224 = vld [vmem:[%s1174 + $0xc0] sm:$0xff]
                  %1225 = vst [vmem:[%s1175 + $0xc0] sm:$0xff] %v1224
                  %v1226 = vld [vmem:[%s1174 + $0xc8] sm:$0xff]
                  %1227 = vst [vmem:[%s1175 + $0xc8] sm:$0xff] %v1226
                  %v1228 = vld [vmem:[%s1174 + $0xd0] sm:$0xff]
                  %1229 = vst [vmem:[%s1175 + $0xd0] sm:$0xff] %v1228
                  %v1230 = vld [vmem:[%s1174 + $0xd8] sm:$0xff]
                  %1231 = vst [vmem:[%s1175 + $0xd8] sm:$0xff] %v1230
                  %v1232 = vld [vmem:[%s1174 + $0xe0] sm:$0xff]
                  %1233 = vst [vmem:[%s1175 + $0xe0] sm:$0xff] %v1232
                  %v1234 = vld [vmem:[%s1174 + $0xe8] sm:$0xff]
                  %1235 = vst [vmem:[%s1175 + $0xe8] sm:$0xff] %v1234
                  %v1236 = vld [vmem:[%s1174 + $0xf0] sm:$0xff]
                  %1237 = vst [vmem:[%s1175 + $0xf0] sm:$0xff] %v1236
                  %v1238 = vld [vmem:[%s1174 + $0xf8] sm:$0xff]
                  %1239 = vst [vmem:[%s1175 + $0xf8] sm:$0xff] %v1238
                  %s1240 = sadd.s32 1, %s1173
                  %p1241 = scmp.ge.s32.totalorder %s1240, %s1166
                  %s1242 = scalar_select %p1241, 0, %s1240
                  %s1243 = smul.u32 %s1242, 256
                  %s1244 = smul.u32 %s1242, 256
                  %s1245 = scalar_lea.vmem %s1037, %s1243 [#allocation2]
                  %s1246 = scalar_lea.vmem %s1048, %s1244
                $region87: #{tpu_custom_call.1} parent=81 // loop_footer
                  %s1170 = sadd.s32 %s1168, 1
                $region88: #{tpu_custom_call.1} parent=81 // loop_footer_branch
                  %1167 = sbr.rel target = $region84
                $region89: #{tpu_custom_call.1} parent=81 // loop_exit
                  _
                %s1247 = sshrl.u32 %s1044, 5
                %s1248 = sand.u32 %s1044, 31
                %s1249 = smul.u32 %s1247, 32
                %s1250 = smul.u32 8, %s1249
                %s1251 = scalar_lea.vmem %s1037, %s1250 [#allocation2]
                %s1252 = smul.u32 8, %s1249
                %s1253 = scalar_lea.vmem %s1048, %s1252
                // While loop
                $region90: #{tpu_custom_call.1} parent=81 // loop_pre_header
                  _
                $region91: #{tpu_custom_call.1} parent=81 // loop_header
                  %s1255 = sphi 0, %s1257
                  %p1256 = scmp.ge.s32.totalorder %s1255, %s1248
                  %s1260 = sphi 0, %s1267
                  %s1261 = sphi %s1251, %s1270
                  %s1262 = sphi %s1253, %s1271
                $region92: #{tpu_custom_call.1} parent=81 // loop_header_branch
                  %1259 = sbr.rel (%p1256) target = $region96
                $region93: #{tpu_custom_call.1} parent=81 // loop_body
                  %v1263 = vld [vmem:[%s1261] sm:$0xff]
                  %1264 = vst [vmem:[%s1262] sm:$0xff] %v1263
                  %s1265 = sadd.s32 1, %s1260
                  %p1266 = scmp.ge.s32.totalorder %s1265, %s1248
                  %s1267 = scalar_select %p1266, 0, %s1265
                  %s1268 = smul.u32 %s1267, 8
                  %s1269 = smul.u32 %s1267, 8
                  %s1270 = scalar_lea.vmem %s1251, %s1268 [#allocation2]
                  %s1271 = scalar_lea.vmem %s1253, %s1269
                $region94: #{tpu_custom_call.1} parent=81 // loop_footer
                  %s1257 = sadd.s32 %s1255, 1
                $region95: #{tpu_custom_call.1} parent=81 // loop_footer_branch
                  %1254 = sbr.rel target = $region91
                $region96: #{tpu_custom_call.1} parent=81 // loop_exit
                  _
              $region82: #{tpu_custom_call.1} parent=59 // pred_fallthru
                _
              // Predicated region
              $region97: #{tpu_custom_call.1} parent=59 // pred_check
                _
              $region98: #{tpu_custom_call.1} parent=59 // pred_check_branch
                %1273 = sbr.rel target = $region100
              $region99: #{tpu_custom_call.1} parent=59 // pred_region
                _
              $region100: #{tpu_custom_call.1} parent=59 // pred_fallthru
                _
            $region60: #{tpu_custom_call.1} parent=55 // pred_fallthru
              _
            // Predicated region
            $region61: #{tpu_custom_call.1} parent=55 // pred_check
              _
            $region62: #{tpu_custom_call.1} parent=55 // pred_check_branch
              %1055 = sbr.rel target = $region64
            $region63: #{tpu_custom_call.1} parent=55 // pred_region
              %s1057 = ssub.s32 256, 1
              %s1058 = sshrl.u32 %s1044, 5
              // While loop
              $region65: #{tpu_custom_call.1} parent=63 // loop_pre_header
                _
              $region66: #{tpu_custom_call.1} parent=63 // loop_header
                %s1060 = sphi 0, %s1062
                %p1061 = scmp.ge.s32.totalorder %s1060, %s1058
                %s1065 = sphi 0, %s1134
                %s1066 = sphi %s1037, %s1137
                %s1067 = sphi %s1048, %s1138
              $region67: #{tpu_custom_call.1} parent=63 // loop_header_branch
                %1064 = sbr.rel (%p1061) target = $region71
              $region68: #{tpu_custom_call.1} parent=63 // loop_body
                %v1068 = vld [vmem:[%s1066] sm:%s1057]
                %1069 = vst [vmem:[%s1067] sm:%s1057] %v1068
                %v1070 = vld [vmem:[%s1066 + $0x8] sm:%s1057]
                %1071 = vst [vmem:[%s1067 + $0x8] sm:%s1057] %v1070
                %v1072 = vld [vmem:[%s1066 + $0x10] sm:%s1057]
                %1073 = vst [vmem:[%s1067 + $0x10] sm:%s1057] %v1072
                %v1074 = vld [vmem:[%s1066 + $0x18] sm:%s1057]
                %1075 = vst [vmem:[%s1067 + $0x18] sm:%s1057] %v1074
                %v1076 = vld [vmem:[%s1066 + $0x20] sm:%s1057]
                %1077 = vst [vmem:[%s1067 + $0x20] sm:%s1057] %v1076
                %v1078 = vld [vmem:[%s1066 + $0x28] sm:%s1057]
                %1079 = vst [vmem:[%s1067 + $0x28] sm:%s1057] %v1078
                %v1080 = vld [vmem:[%s1066 + $0x30] sm:%s1057]
                %1081 = vst [vmem:[%s1067 + $0x30] sm:%s1057] %v1080
                %v1082 = vld [vmem:[%s1066 + $0x38] sm:%s1057]
                %1083 = vst [vmem:[%s1067 + $0x38] sm:%s1057] %v1082
                %v1084 = vld [vmem:[%s1066 + $0x40] sm:%s1057]
                %1085 = vst [vmem:[%s1067 + $0x40] sm:%s1057] %v1084
                %v1086 = vld [vmem:[%s1066 + $0x48] sm:%s1057]
                %1087 = vst [vmem:[%s1067 + $0x48] sm:%s1057] %v1086
                %v1088 = vld [vmem:[%s1066 + $0x50] sm:%s1057]
                %1089 = vst [vmem:[%s1067 + $0x50] sm:%s1057] %v1088
                %v1090 = vld [vmem:[%s1066 + $0x58] sm:%s1057]
                %1091 = vst [vmem:[%s1067 + $0x58] sm:%s1057] %v1090
                %v1092 = vld [vmem:[%s1066 + $0x60] sm:%s1057]
                %1093 = vst [vmem:[%s1067 + $0x60] sm:%s1057] %v1092
                %v1094 = vld [vmem:[%s1066 + $0x68] sm:%s1057]
                %1095 = vst [vmem:[%s1067 + $0x68] sm:%s1057] %v1094
                %v1096 = vld [vmem:[%s1066 + $0x70] sm:%s1057]
                %1097 = vst [vmem:[%s1067 + $0x70] sm:%s1057] %v1096
                %v1098 = vld [vmem:[%s1066 + $0x78] sm:%s1057]
                %1099 = vst [vmem:[%s1067 + $0x78] sm:%s1057] %v1098
                %v1100 = vld [vmem:[%s1066 + $0x80] sm:%s1057]
                %1101 = vst [vmem:[%s1067 + $0x80] sm:%s1057] %v1100
                %v1102 = vld [vmem:[%s1066 + $0x88] sm:%s1057]
                %1103 = vst [vmem:[%s1067 + $0x88] sm:%s1057] %v1102
                %v1104 = vld [vmem:[%s1066 + $0x90] sm:%s1057]
                %1105 = vst [vmem:[%s1067 + $0x90] sm:%s1057] %v1104
                %v1106 = vld [vmem:[%s1066 + $0x98] sm:%s1057]
                %1107 = vst [vmem:[%s1067 + $0x98] sm:%s1057] %v1106
                %v1108 = vld [vmem:[%s1066 + $0xa0] sm:%s1057]
                %1109 = vst [vmem:[%s1067 + $0xa0] sm:%s1057] %v1108
                %v1110 = vld [vmem:[%s1066 + $0xa8] sm:%s1057]
                %1111 = vst [vmem:[%s1067 + $0xa8] sm:%s1057] %v1110
                %v1112 = vld [vmem:[%s1066 + $0xb0] sm:%s1057]
                %1113 = vst [vmem:[%s1067 + $0xb0] sm:%s1057] %v1112
                %v1114 = vld [vmem:[%s1066 + $0xb8] sm:%s1057]
                %1115 = vst [vmem:[%s1067 + $0xb8] sm:%s1057] %v1114
                %v1116 = vld [vmem:[%s1066 + $0xc0] sm:%s1057]
                %1117 = vst [vmem:[%s1067 + $0xc0] sm:%s1057] %v1116
                %v1118 = vld [vmem:[%s1066 + $0xc8] sm:%s1057]
                %1119 = vst [vmem:[%s1067 + $0xc8] sm:%s1057] %v1118
                %v1120 = vld [vmem:[%s1066 + $0xd0] sm:%s1057]
                %1121 = vst [vmem:[%s1067 + $0xd0] sm:%s1057] %v1120
                %v1122 = vld [vmem:[%s1066 + $0xd8] sm:%s1057]
                %1123 = vst [vmem:[%s1067 + $0xd8] sm:%s1057] %v1122
                %v1124 = vld [vmem:[%s1066 + $0xe0] sm:%s1057]
                %1125 = vst [vmem:[%s1067 + $0xe0] sm:%s1057] %v1124
                %v1126 = vld [vmem:[%s1066 + $0xe8] sm:%s1057]
                %1127 = vst [vmem:[%s1067 + $0xe8] sm:%s1057] %v1126
                %v1128 = vld [vmem:[%s1066 + $0xf0] sm:%s1057]
                %1129 = vst [vmem:[%s1067 + $0xf0] sm:%s1057] %v1128
                %v1130 = vld [vmem:[%s1066 + $0xf8] sm:%s1057]
                %1131 = vst [vmem:[%s1067 + $0xf8] sm:%s1057] %v1130
                %s1132 = sadd.s32 1, %s1065
                %p1133 = scmp.ge.s32.totalorder %s1132, %s1058
                %s1134 = scalar_select %p1133, 0, %s1132
                %s1135 = smul.u32 %s1134, 256
                %s1136 = smul.u32 %s1134, 256
                %s1137 = scalar_lea.vmem %s1037, %s1135 [#allocation2]
                %s1138 = scalar_lea.vmem %s1048, %s1136
              $region69: #{tpu_custom_call.1} parent=63 // loop_footer
                %s1062 = sadd.s32 %s1060, 1
              $region70: #{tpu_custom_call.1} parent=63 // loop_footer_branch
                %1059 = sbr.rel target = $region66
              $region71: #{tpu_custom_call.1} parent=63 // loop_exit
                _
              %s1139 = sshrl.u32 %s1044, 5
              %s1140 = sand.u32 %s1044, 31
              %s1141 = smul.u32 %s1139, 32
              %s1142 = smul.u32 8, %s1141
              %s1143 = scalar_lea.vmem %s1037, %s1142 [#allocation2]
              %s1144 = smul.u32 8, %s1141
              %s1145 = scalar_lea.vmem %s1048, %s1144
              // While loop
              $region72: #{tpu_custom_call.1} parent=63 // loop_pre_header
                _
              $region73: #{tpu_custom_call.1} parent=63 // loop_header
                %s1147 = sphi 0, %s1149
                %p1148 = scmp.ge.s32.totalorder %s1147, %s1140
                %s1152 = sphi 0, %s1159
                %s1153 = sphi %s1143, %s1162
                %s1154 = sphi %s1145, %s1163
              $region74: #{tpu_custom_call.1} parent=63 // loop_header_branch
                %1151 = sbr.rel (%p1148) target = $region78
              $region75: #{tpu_custom_call.1} parent=63 // loop_body
                %v1155 = vld [vmem:[%s1153] sm:%s1057]
                %1156 = vst [vmem:[%s1154] sm:%s1057] %v1155
                %s1157 = sadd.s32 1, %s1152
                %p1158 = scmp.ge.s32.totalorder %s1157, %s1140
                %s1159 = scalar_select %p1158, 0, %s1157
                %s1160 = smul.u32 %s1159, 8
                %s1161 = smul.u32 %s1159, 8
                %s1162 = scalar_lea.vmem %s1143, %s1160 [#allocation2]
                %s1163 = scalar_lea.vmem %s1145, %s1161
              $region76: #{tpu_custom_call.1} parent=63 // loop_footer
                %s1149 = sadd.s32 %s1147, 1
              $region77: #{tpu_custom_call.1} parent=63 // loop_footer_branch
                %1146 = sbr.rel target = $region73
              $region78: #{tpu_custom_call.1} parent=63 // loop_exit
                _
            $region64: #{tpu_custom_call.1} parent=55 // pred_fallthru
              _
          $region56: #{tpu_custom_call.1} parent=51 // pred_fallthru
            _
          %1274 = vnop
        $region52: #{tpu_custom_call.1} parent=47 // pred_fallthru
          _
      $region48: #{tpu_custom_call.1} parent=5 // pred_fallthru
        _
      %p1275 = scmp.le.s32.totalorder 2, %s13
      // Predicated region
      $region101: #{tpu_custom_call.1} parent=5 // pred_check
        %p1276 = pneg %p1275
      $region102: #{tpu_custom_call.1} parent=5 // pred_check_branch
        %1278 = sbr.rel (%p1276) target = $region104
      $region103: #{tpu_custom_call.1} parent=5 // pred_region
        %s1279 = ssub.s32 %s13, 2
        // Predicated region
        $region105: #{tpu_custom_call.1} parent=103 // pred_check
          %p1280 = pneg %p194
        $region106: #{tpu_custom_call.1} parent=103 // pred_check_branch
          %1282 = sbr.rel (%p1280) target = $region108
        $region107: #{tpu_custom_call.1} parent=103 // pred_region
          %s1283 = sand.u32 %s179, 1
          %s1284 = sand.u32 %s179, 1
          %s1285 = smul.addr %s1284, 256
          %s1286 = scalar_lea.vmem [#allocation2], %s1285
        $region108: #{tpu_custom_call.1} parent=103 // pred_fallthru
          _
      $region104: #{tpu_custom_call.1} parent=5 // pred_fallthru
        _
    $region6: #{tpu_custom_call.1} parent=1 // loop_footer
      %s17 = sadd.s32 1, %s13
    $region7: #{tpu_custom_call.1} parent=1 // loop_footer_branch
      %12 = sbr.rel target = $region3
    $region8: #{tpu_custom_call.1} parent=1 // loop_exit
      _

</llo_original>
